<compile_context>
chip_gen: v5e
topology: v5e:2x2
jax: 0.10.0
libtpu: 0.0.40
codegen_flags: <defaults>
</compile_context>

<pallas_src>
import functools

import jax
import jax.numpy as jnp
from jax import lax
from jax.experimental import pallas as pl
from jax.experimental.pallas import tpu as pltpu

_LANES = 128
_SUBLANES = 8
_TILE_ELEMS = _SUBLANES * _LANES      # 1024 = one (8, 128) f32 vreg tile
_CHUNK_ROWS = 128                     # rows per inner accumulation step (64 KiB f32 / input)
_MAX_BLOCK_ROWS = 8192                # 4 MiB f32 per input per grid step
_SMALL_BYPASS_ELEMS = 65536           # below this, a fused XLA reduce beats the kernel


def _round_down(x, m):
    return (x // m) * m


def _make_mse_partial_kernel(block_rows, chunk_rows, rows_valid):
    """Build a kernel reducing one (block_rows, 128) tile to an (8, 128) partial sum."""
    n_chunks = block_rows // chunk_rows
    groups = chunk_rows // _SUBLANES

    def kernel(pred_ref, tgt_ref, part_ref):
        block_start = pl.program_id(0) * block_rows
        # Rows in this block holding real data (may exceed block_rows for non-last
        # blocks; the comparison below handles that naturally).
        valid_rows = rows_valid - block_start
        row_in_chunk = lax.broadcasted_iota(jnp.int32, (chunk_rows, _LANES), 0)

        def body(c, acc):
            r = pl.multiple_of(c * chunk_rows, chunk_rows)
            p = pred_ref[pl.ds(r, chunk_rows), :].astype(jnp.float32)
            t = tgt_ref[pl.ds(r, chunk_rows), :].astype(jnp.float32)
            d = p - t
            sq = d * d
            # Kill rows past the true end of the data (ragged last block). The
            # out-of-bounds part of an edge block is undefined (possibly NaN), so
            # select against a mask instead of relying on zero padding.
            sq = jnp.where((row_in_chunk + r) < valid_rows, sq, 0.0)
            # (chunk, 128) -> (groups, 8, 128); axis-0 sum is plain vreg adds (VPU).
            return acc + jnp.sum(sq.reshape(groups, _SUBLANES, _LANES), axis=0)

        acc = lax.fori_loop(0, n_chunks, body,
                            jnp.zeros((_SUBLANES, _LANES), jnp.float32),
                            unroll=min(n_chunks, 8))
        part_ref[...] = acc

    return kernel


def _mse_forward(pred, tgt, max_block_rows, chunk_rows, min_kernel_elems):
    n_elems = pred.size
    if n_elems == 0:
        # torch.nn.MSELoss over an empty tensor is NaN.
        return jnp.full((), jnp.nan, jnp.float32)

    # Small-input bypass: relayout + kernel launch costs more than the math.
    if n_elems < max(min_kernel_elems, _TILE_ELEMS):
        d = pred.astype(jnp.float32) - tgt.astype(jnp.float32)
        return jnp.mean(d * d)

    # Kernel runs on the 1024-aligned prefix viewed as a lane-dense (rows, 128)
    # slab (a free bitcast reshape when n_elems is already aligned).  The <1024
    # element ragged tail is folded in with plain JAX below.
    n_main = _round_down(n_elems, _TILE_ELEMS)
    rows_main = n_main // _LANES          # multiple of 8
    tail = n_elems - n_main               # < 1024

    # --- block sizing (all static Python ints) ---
    chunk = _CHUNK_ROWS if chunk_rows is None else chunk_rows
    chunk = min(chunk, rows_main)
    chunk = max(_round_down(chunk, _SUBLANES), _SUBLANES)
    n_units = pl.cdiv(rows_main, chunk)
    max_units_per_block = max(max_block_rows // chunk, 1)
    n_blocks = pl.cdiv(n_units, max_units_per_block)
    if n_units >= 2:
        # v7x megacore: at least two (ideally an even number of) balanced blocks.
        n_blocks = max(n_blocks, 2)
        if n_blocks % 2:
            n_blocks += 1
        n_blocks = min(n_blocks, n_units)
    units_per_block = pl.cdiv(n_units, n_blocks)
    block_rows = units_per_block * chunk           # <= rows_main, multiple of chunk
    n_blocks = pl.cdiv(rows_main, block_rows)

    pred_flat = pred.reshape(-1)
    tgt_flat = tgt.reshape(-1)
    if n_main == n_elems:
        pred2d = pred_flat.reshape(rows_main, _LANES)   # free bitcast, no copy
        tgt2d = tgt_flat.reshape(rows_main, _LANES)
    else:
        # TODO(synk): experiment with CompilerParams(allow_input_fusion=...) so this
        # prefix slice fuses into the kernel's input DMA and avoids the copy.
        pred2d = pred_flat[:n_main].reshape(rows_main, _LANES)
        tgt2d = tgt_flat[:n_main].reshape(rows_main, _LANES)

    partials = pl.pallas_call(
        _make_mse_partial_kernel(block_rows, chunk, rows_main),
        out_shape=jax.ShapeDtypeStruct((n_blocks * _SUBLANES, _LANES), jnp.float32),
        grid=(n_blocks,),
        in_specs=[
            pl.BlockSpec((block_rows, _LANES), lambda i: (i, 0)),
            pl.BlockSpec((block_rows, _LANES), lambda i: (i, 0)),
        ],
        out_specs=pl.BlockSpec((_SUBLANES, _LANES), lambda i: (i, 0)),
        compiler_params=pltpu.CompilerParams(
            dimension_semantics=("parallel",),      # independent blocks -> v7x megacore
            vmem_limit_bytes=32 * 1024 * 1024,      # 2 inputs x 2 buffers x 4 MiB = 16 MiB
        ),
    )(pred2d, tgt2d)

    total = jnp.sum(partials, dtype=jnp.float32)
    if tail:
        dt = (pred_flat[n_main:].astype(jnp.float32)
              - tgt_flat[n_main:].astype(jnp.float32))
        total = total + jnp.sum(dt * dt)
    return total / jnp.float32(n_elems)


@functools.partial(jax.custom_vjp, nondiff_argnums=(2, 3, 4))
def _mse_loss(pred, tgt, max_block_rows, chunk_rows, min_kernel_elems):
    return _mse_forward(pred, tgt, max_block_rows, chunk_rows, min_kernel_elems)


def _mse_loss_fwd(pred, tgt, max_block_rows, chunk_rows, min_kernel_elems):
    loss = _mse_forward(pred, tgt, max_block_rows, chunk_rows, min_kernel_elems)
    return loss, (pred, tgt)


def _mse_loss_bwd(max_block_rows, chunk_rows, min_kernel_elems, res, g):
    pred, tgt = res
    n = max(pred.size, 1)
    d = pred.astype(jnp.float32) - tgt.astype(jnp.float32)
    gd = (g.astype(jnp.float32) * (2.0 / n)) * d
    return gd.astype(pred.dtype), (-gd).astype(tgt.dtype)


_mse_loss.defvjp(_mse_loss_fwd, _mse_loss_bwd)


def position_mse_loss(predicted_positions, target_positions, *,
                      max_block_rows=_MAX_BLOCK_ROWS,
                      chunk_rows=None,
                      min_kernel_elems=_SMALL_BYPASS_ELEMS):
    """MSE loss between predicted and target 3D joint positions (mean over all elements).

    Args:
        predicted_positions: (Batch, NumJoints, 3)
        target_positions:    (Batch, NumJoints, 3)
    Returns:
        Scalar float32 MSE loss. Differentiable via a custom VJP.
    """
    if predicted_positions.shape != target_positions.shape:
        raise ValueError(
            f"Shape mismatch: predicted_positions {predicted_positions.shape} "
            f"vs target_positions {target_positions.shape}")
    return _mse_loss(predicted_positions, target_positions,
                     int(max_block_rows),
                     None if chunk_rows is None else int(chunk_rows),
                     int(min_kernel_elems))


if __name__ == "__main__":
    key = jax.random.PRNGKey(0)
    k = jax.random.split(key, 8)

    def ref_loss(p, t):
        d = p.astype(jnp.float32) - t.astype(jnp.float32)
        return jnp.mean(d * d)

    # 1) Tiny (Batch, NumJoints, 3): exercises the small-input bypass.
    pred = jax.random.normal(k[0], (2, 8, 3), dtype=jnp.float32)
    tgt = jax.random.normal(k[1], (2, 8, 3), dtype=jnp.float32)
    loss = jax.block_until_ready(position_mse_loss(pred, tgt))
    assert jnp.allclose(loss, ref_loss(pred, tgt), rtol=1e-5, atol=1e-6), loss

    # 2) Kernel path: single block + <1024-element ragged tail handled in JAX.
    pred = jax.random.normal(k[2], (7, 61, 3), dtype=jnp.float32)
    tgt = jax.random.normal(k[3], (7, 61, 3), dtype=jnp.float32)
    loss = jax.block_until_ready(position_mse_loss(pred, tgt, min_kernel_elems=0))
    assert jnp.allclose(loss, ref_loss(pred, tgt), rtol=1e-5, atol=1e-6), loss

    # 3) Kernel path: multiple blocks with an iota-masked ragged last block.
    pred = jax.random.normal(k[4], (8, 130, 3), dtype=jnp.float32)
    tgt = jax.random.normal(k[5], (8, 130, 3), dtype=jnp.float32)
    loss = jax.block_until_ready(position_mse_loss(
        pred, tgt, max_block_rows=16, chunk_rows=8, min_kernel_elems=0))
    assert jnp.allclose(loss, ref_loss(pred, tgt), rtol=1e-5, atol=1e-6), loss

    # 4) Kernel path: 1024-aligned fast path (zero-copy reshape), bf16 inputs.
    pred = jax.random.normal(k[6], (8, 128, 3), dtype=jnp.bfloat16)
    tgt = jax.random.normal(k[7], (8, 128, 3), dtype=jnp.bfloat16)
    loss = jax.block_until_ready(position_mse_loss(pred, tgt, min_kernel_elems=0))
    assert jnp.allclose(loss, ref_loss(pred, tgt), rtol=1e-4, atol=1e-6), loss

    # 5) Gradients via the custom VJP (backward is plain fused XLA).
    pred = jax.random.normal(k[2], (7, 61, 3), dtype=jnp.float32)
    tgt = jax.random.normal(k[3], (7, 61, 3), dtype=jnp.float32)
    gp, gt = jax.grad(
        lambda p, t: position_mse_loss(p, t, min_kernel_elems=0),
        argnums=(0, 1))(pred, tgt)
    ref_gp = 2.0 * (pred - tgt) / pred.size
    assert jnp.allclose(gp, ref_gp, rtol=1e-5, atol=1e-6)
    assert jnp.allclose(gt, -ref_gp, rtol=1e-5, atol=1e-6)

    print("KERNEL_OK")
</pallas_src>

<mosaic_0001>
module attributes {stable_mosaic.version = 11 : i64} {
  func.func @kernel(%arg0: i32, %arg1: memref<8x128xf32, #tpu.memory_space<vmem>>, %arg2: memref<8x128xf32, #tpu.memory_space<vmem>>, %arg3: memref<8x128xf32, #tpu.memory_space<vmem>>) attributes {dimension_semantics = [#tpu.dimension_semantics<parallel>], iteration_bounds = array<i64: 1>, scalar_prefetch = 0 : i64, scratch_operands = 0 : i64, tpu.core_type = #tpu.core_type<tc>, window_params = [{transform_indices = @transform_0, window_bounds = array<i64: 8, 128>}, {transform_indices = @transform_1, window_bounds = array<i64: 8, 128>}, {transform_indices = @transform_2, window_bounds = array<i64: 8, 128>}]} {
    %c8_i32 = arith.constant 8 : i32
    %0 = arith.muli %arg0, %c8_i32 : i32
    %c8_i32_0 = arith.constant 8 : i32
    %1 = arith.subi %c8_i32_0, %0 : i32
    %2 = tpu.iota {dimensions = array<i32: 0>} : vector<8x128xi32>
    %cst = arith.constant 0.000000e+00 : f32
    %3 = vector.broadcast %cst : f32 to vector<8x128xf32>
    %c0_i32 = arith.constant 0 : i32
    %c8_i32_1 = arith.constant 8 : i32
    %4 = arith.muli %c0_i32, %c8_i32_1 : i32
    %5 = tpu.assume_multiple %4, 8 : i32
    %6 = arith.index_cast %5 : i32 to index
    %c0 = arith.constant 0 : index
    %7 = vector.load %arg1[%6, %c0] : memref<8x128xf32, #tpu.memory_space<vmem>>, vector<8x128xf32>
    %8 = arith.index_cast %5 : i32 to index
    %c0_2 = arith.constant 0 : index
    %9 = vector.load %arg2[%8, %c0_2] : memref<8x128xf32, #tpu.memory_space<vmem>>, vector<8x128xf32>
    %10 = arith.subf %7, %9 : vector<8x128xf32>
    %11 = arith.mulf %10, %10 : vector<8x128xf32>
    %12 = vector.broadcast %5 : i32 to vector<8x128xi32>
    %13 = arith.addi %2, %12 : vector<8x128xi32>
    %14 = vector.broadcast %1 : i32 to vector<8x128xi32>
    %15 = arith.cmpi slt, %13, %14 : vector<8x128xi32>
    %cst_3 = arith.constant 0.000000e+00 : f32
    %16 = vector.broadcast %cst_3 : f32 to vector<8x128xf32>
    %17 = arith.select %15, %11, %16 : vector<8x128xi1>, vector<8x128xf32>
    %18 = vector.shape_cast %17 : vector<8x128xf32> to vector<1x8x128xf32>
    %cst_4 = arith.constant dense<0.000000e+00> : vector<8x128xf32>
    %19 = vector.multi_reduction <add>, %18, %cst_4 [0] : vector<1x8x128xf32> to vector<8x128xf32>
    %20 = arith.addf %3, %19 : vector<8x128xf32>
    %c1_i32 = arith.constant 1 : i32
    %c0_5 = arith.constant 0 : index
    %c0_6 = arith.constant 0 : index
    %21 = vector.load %arg3[%c0_5, %c0_6] : memref<8x128xf32, #tpu.memory_space<vmem>>, vector<8x128xf32>
    tpu.vector_store %arg3[%c0_5, %c0_6], %20 {strides = array<i32>} : memref<8x128xf32, #tpu.memory_space<vmem>>, vector<8x128xf32>,
    return
  }
  func.func @transform_0(%arg0: i32) -> (i32, i32) {
    %c0_i32 = arith.constant 0 : i32
    %c0_i32_0 = arith.constant 0 : i32
    return %arg0, %c0_i32 : i32, i32
  }
  func.func @transform_1(%arg0: i32) -> (i32, i32) {
    %c0_i32 = arith.constant 0 : i32
    %c0_i32_0 = arith.constant 0 : i32
    return %arg0, %c0_i32 : i32, i32
  }
  func.func @transform_2(%arg0: i32) -> (i32, i32) {
    %c0_i32 = arith.constant 0 : i32
    %c0_i32_0 = arith.constant 0 : i32
    return %arg0, %c0_i32 : i32, i32
  }
}

</mosaic_0001>

<llo_original>
// kernel: tpu_custom_call.1
$region0: #{tpu_custom_call.1}
  #allocation0 [shape = 'u32[]', space=smem, size = 0x4, offset = 0x4, fixed_abs, tag = 'smem constant byte address 0x4 - core index']
  #allocation1 [shape = 'u32[72,128]{1,0:T(1,128)}', space=vmem, size = 0x9000, scoped, tag = 'internal scratch']
  %s0 = inlined_call_operand.hbm [shape: f32[8,128], index: 0, kind: input, shape index: {}]
  %s1 = inlined_call_operand.hbm [shape: f32[8,128], index: 1, kind: input, shape index: {}]
  %s2 = inlined_call_operand.hbm [shape: f32[8,128], index: 2, kind: output, shape index: {}]
  %s3 = sld [smem:[#allocation0]]
  $region26: #{tpu_custom_call.1} parent=0
    _
  %s5 = ssub.s32 1, %s3
  %s6 = scalar_select 0, %s5, %s3
  $region1: #{tpu_custom_call.1} parent=0
    #allocation2 [shape = 'u8[4096]{0}', space=vmem, size = 0x1000, scoped, tag = 'input window, operand 0, single buffered']
    #allocation3 [shape = 's32[1]{0}', space=sflag, size = 0x4, scoped, tag = 'scoped memory for tpu_custom_call.1']
    #allocation4 [shape = 's32[1]{0}', space=sflag, size = 0x4, scoped, tag = 'scoped memory for tpu_custom_call.1']
    #allocation5 [shape = 'u8[4096]{0}', space=vmem, size = 0x1000, scoped, tag = 'input window, operand 1, single buffered']
    #allocation6 [shape = 's32[1]{0}', space=sflag, size = 0x4, scoped, tag = 'scoped memory for tpu_custom_call.1']
    #allocation7 [shape = 'u8[4096]{0}', space=vmem, size = 0x1000, scoped, tag = 'output window, operand 0, single buffered']
    %7 = vsyncpa [#allocation3], 0
    %8 = vsyncpa [#allocation6], 0
    %9 = vsyncpa [#allocation4], 0
    // Predicated region
    $region2: #{tpu_custom_call.1} parent=1 // pred_check
      _
    $region3: #{tpu_custom_call.1} parent=1 // pred_check_branch
      %11 = sbr.rel (0) target = $region5
    $region4: #{tpu_custom_call.1} parent=1 // pred_region
      %13 = vsyncadd [#allocation3], 0
      %s15 = sshll.u32 %s0, 4
      %s16 = int_to_ptr.hbm [resolvable:$true] %s15
      %s17 = sshll.u32 [#allocation2], 4
      %s18 = int_to_ptr.vmem [resolvable:$true] %s17
      %20 = dma.hbm_to_vmem [thread:$0]  %s16, 128, %s18, [#allocation3]
    $region5: #{tpu_custom_call.1} parent=1 // pred_fallthru
      _
    // Predicated region
    $region6: #{tpu_custom_call.1} parent=1 // pred_check
      _
    $region7: #{tpu_custom_call.1} parent=1 // pred_check_branch
      %22 = sbr.rel (0) target = $region9
    $region8: #{tpu_custom_call.1} parent=1 // pred_region
      %24 = vsyncadd [#allocation6], 0
      %s26 = sshll.u32 %s1, 4
      %s27 = int_to_ptr.hbm [resolvable:$true] %s26
      %s28 = sshll.u32 [#allocation5], 4
      %s29 = int_to_ptr.vmem [resolvable:$true] %s28
      %31 = dma.hbm_to_vmem [thread:$0]  %s27, 128, %s29, [#allocation6]
    $region9: #{tpu_custom_call.1} parent=1 // pred_fallthru
      _
    // Predicated region
    $region10: #{tpu_custom_call.1} parent=1 // pred_check
      _
    $region11: #{tpu_custom_call.1} parent=1 // pred_check_branch
      %33 = sbr.rel (0) target = $region13
    $region12: #{tpu_custom_call.1} parent=1 // pred_region
      %35 = dma.done [#allocation3], 128
    $region13: #{tpu_custom_call.1} parent=1 // pred_fallthru
      _
    // Predicated region
    $region14: #{tpu_custom_call.1} parent=1 // pred_check
      _
    $region15: #{tpu_custom_call.1} parent=1 // pred_check_branch
      %37 = sbr.rel (0) target = $region17
    $region16: #{tpu_custom_call.1} parent=1 // pred_region
      %39 = dma.done [#allocation6], 128
    $region17: #{tpu_custom_call.1} parent=1 // pred_fallthru
      _
    %s40 = smul.u32 0, 8
    %s41 = ssub.s32 8, %s40
    %v42 = vlaneseq
    %v43 = vshrl.u32 %v42, 7
    %v44 = vld [vmem:[#allocation2] sm:$0xff]
    %v45 = vld [vmem:[#allocation5] sm:$0xff]
    %v46 = vsub.f32 %v44, %v45
    %v47 = vmul.f32 %v46, %v46
    %v48 = vstv 0
    %v49 = vadd.s32 %v43, %v48
    %v50 = vstv %s41
    %vm51 = vcmp.lt.s32.totalorder %v49, %v50
    %v52 = vsel %vm51, %v47, 0.0
    %v53 = vadd.f32 %v52, 0.0
    %v54 = vadd.f32 %v53, 0.0
    %55 = vst [vmem:[#allocation7] sm:$0xff] %v54
    // Predicated region
    $region18: #{tpu_custom_call.1} parent=1 // pred_check
      _
    $region19: #{tpu_custom_call.1} parent=1 // pred_check_branch
      %57 = sbr.rel (0) target = $region21
    $region20: #{tpu_custom_call.1} parent=1 // pred_region
      %59 = vsyncadd [#allocation4], 0
      %s61 = sshll.u32 [#allocation7], 4
      %s62 = int_to_ptr.vmem [resolvable:$true] %s61
      %s63 = sshll.u32 %s2, 4
      %s64 = int_to_ptr.hbm [resolvable:$true] %s63
      %66 = dma.vmem_to_hbm [thread:$0]  %s62, 128, %s64, [#allocation4]
    $region21: #{tpu_custom_call.1} parent=1 // pred_fallthru
      _
    // Predicated region
    $region22: #{tpu_custom_call.1} parent=1 // pred_check
      _
    $region23: #{tpu_custom_call.1} parent=1 // pred_check_branch
      %68 = sbr.rel (0) target = $region25
    $region24: #{tpu_custom_call.1} parent=1 // pred_region
      %70 = dma.done [#allocation4], 128
    $region25: #{tpu_custom_call.1} parent=1 // pred_fallthru
      _
    %71 = vsyncpa [#allocation3], 1
    %72 = vsyncpa [#allocation6], 1
    %73 = vsyncpa [#allocation4], 1

</llo_original>
